<compile_context>
chip_gen: v7x
topology: tpu7x:2x2x1
jax: 0.10.0
libtpu: 0.0.40
codegen_flags: <defaults>
</compile_context>

<pallas_src>
import jax
import jax.numpy as jnp
from jax.experimental import pallas as pl
from jax.experimental.pallas import tpu as pltpu


_TARGET_TILE_BYTES = 4 * 1024 * 1024     # ~4 MiB tiles: per-step overhead <10% on all gens
_VMEM_LIMIT_BYTES = 32 * 1024 * 1024     # 4 x 4 MiB double-buffered tiles + headroom
_XLA_FALLBACK_BYTES = 2 * 1024 * 1024    # below this a fused XLA multiply beats kernel dispatch


def _round_up(n, m):
    return ((n + m - 1) // m) * m


# ----------------------------- kernels ---------------------------------------


def _drop_path_kernel_per_sample(scales_ref, x_ref, o_ref):
    """One (1, S, L) tile of one sample.  scales_ref: SMEM (B,) f32 per-sample scale."""
    b = pl.program_id(1)
    o_ref[...] = x_ref[...] * scales_ref[b].astype(o_ref.dtype)


def _drop_path_kernel_full_batch(s_ref, x_ref, o_ref):
    """One (B, Lb) lane-slab covering all samples.  s_ref: (B, 1) scale in x's dtype."""
    o_ref[...] = x_ref[...] * s_ref[...]


# ----------------------------- dispatchers ------------------------------------


def _drop_path_per_sample(x3d, scales, *, donate_x):
    """Dense path: x3d is a (B, R, L) view with L in {512,256,128}; no padding anywhere."""
    B, R, L = x3d.shape
    itemsize = jnp.dtype(x3d.dtype).itemsize
    max_rows = max(8, (_TARGET_TILE_BYTES // (L * itemsize)) // 8 * 8)
    S = R if R <= max_rows else max_rows              # block sublane dim: full R or mult of 8
    nr = pl.cdiv(R, S)                                # partial last block masked by Pallas
    grid = (nr, B)                                    # larger parallel axis first (megacore)

    return pl.pallas_call(
        _drop_path_kernel_per_sample,
        out_shape=jax.ShapeDtypeStruct((B, R, L), x3d.dtype),
        grid_spec=pltpu.PrefetchScalarGridSpec(
            num_scalar_prefetch=1,                    # scales -> SMEM
            grid=grid,
            in_specs=[pl.BlockSpec((1, S, L), lambda r, b, s: (b, r, 0))],
            out_specs=pl.BlockSpec((1, S, L), lambda r, b, s: (b, r, 0)),
        ),
        compiler_params=pltpu.CompilerParams(
            dimension_semantics=("parallel", "parallel"),
            vmem_limit_bytes=_VMEM_LIMIT_BYTES,
        ),
        # index 1 because the scalar-prefetch arg (scales) is input 0.
        input_output_aliases=({1: 0} if donate_x else {}),
    )(scales, x3d)


def _drop_path_full_batch(x2d, scales, *, donate_x):
    """Ragged-F path: (B, Lb) lane-slabs over the raw (B, F) view, partial tail masked."""
    B, F = x2d.shape
    itemsize = jnp.dtype(x2d.dtype).itemsize
    max_lanes = max(128, (_TARGET_TILE_BYTES // (B * itemsize)) // 128 * 128)
    Lb = min(max_lanes, _round_up(F, 128))
    nf = pl.cdiv(F, Lb)
    s2d = scales.astype(x2d.dtype).reshape(B, 1)      # per-sample scale, x dtype, resident

    return pl.pallas_call(
        _drop_path_kernel_full_batch,
        out_shape=jax.ShapeDtypeStruct((B, F), x2d.dtype),
        grid=(nf,),
        in_specs=[pl.BlockSpec((B, 1), lambda j: (0, 0)),
                  pl.BlockSpec((B, Lb), lambda j: (0, j))],
        out_specs=pl.BlockSpec((B, Lb), lambda j: (0, j)),
        compiler_params=pltpu.CompilerParams(
            dimension_semantics=("parallel",),
            vmem_limit_bytes=_VMEM_LIMIT_BYTES,
        ),
        input_output_aliases=({1: 0} if donate_x else {}),
    )(s2d, x2d)


# ----------------------------- public API -------------------------------------


def drop_path(x, drop_prob: float = 0.0, training: bool = False, *,
              key=None, donate_x: bool = False, force_pallas: bool = False):
    """Pallas DropPath.  Per-sample (axis 0) stochastic depth, any rank >= 1."""
    if drop_prob == 0.0 or not training:
        return x
    if not (0.0 < drop_prob < 1.0):
        raise ValueError(f"drop_prob must be in [0, 1), got {drop_prob}")
    if key is None:
        raise ValueError(
            "drop_path needs an explicit PRNG key when training with drop_prob > 0 "
            "(otherwise every call would reuse the identical mask)."
        )

    keep_prob = 1.0 - float(drop_prob)
    orig_shape = x.shape
    B = x.shape[0]
    itemsize = jnp.dtype(x.dtype).itemsize

    # Per-sample scale in {0, 1/keep_prob}; mask derived in f32 regardless of x dtype.
    u = jax.random.uniform(key, (B,), dtype=jnp.float32)
    scales = jnp.floor(keep_prob + u) * (1.0 / keep_prob)

    # Tiny tensors: kernel dispatch + per-step overhead dominates -> fused XLA multiply.
    if not force_pallas and x.size * itemsize < _XLA_FALLBACK_BYTES:
        s = scales.astype(x.dtype).reshape((B,) + (1,) * (x.ndim - 1))
        return x * s

    x2d = x.reshape(B, -1)                            # free metadata reshape
    F = x2d.shape[1]

    if F % 128 == 0:
        L = next(l for l in (512, 256, 128) if F % l == 0)
        out3d = _drop_path_per_sample(x2d.reshape(B, F // L, L), scales, donate_x=donate_x)
        return out3d.reshape(orig_shape)

    out2d = _drop_path_full_batch(x2d, scales, donate_x=donate_x)
    return out2d.reshape(orig_shape)


class DropPath:
    """Mirror of the PyTorch module: drop_prob + training flag.

    Prefer passing an explicit `key` per call; the internal key-splitting fallback is a
    convenience and is NOT jit/trace-safe (it mutates Python state between calls).
    """

    def __init__(self, drop_prob=None, *, seed=0):
        self.drop_prob = drop_prob
        self.training = True
        self._key = jax.random.PRNGKey(seed)

    def __call__(self, x, key=None, **kwargs):
        p = 0.0 if self.drop_prob is None else float(self.drop_prob)
        if p == 0.0 or not self.training:
            return x
        if key is None:
            self._key, key = jax.random.split(self._key)
        return drop_path(x, p, self.training, key=key, **kwargs)


# ----------------------------- self-test --------------------------------------


if __name__ == "__main__":
    root = jax.random.PRNGKey(0)
    kx, kmask, kx2, kmask2, kx3, kmask3 = jax.random.split(root, 6)

    # --- Test 1: small NCHW f32, F = 1024 (dense per-sample tiled path) ---
    B, C, H, W = 2, 4, 16, 16
    x = jax.random.normal(kx, (B, C, H, W), dtype=jnp.float32)
    drop_prob = 0.25
    keep_prob = 1.0 - drop_prob

    out = jax.block_until_ready(
        drop_path(x, drop_prob, training=True, key=kmask, force_pallas=True))
    assert out.shape == x.shape and out.dtype == x.dtype

    u = jax.random.uniform(kmask, (B,), dtype=jnp.float32)
    mask = jnp.floor(keep_prob + u).reshape(B, 1, 1, 1)
    ref = x / keep_prob * mask
    assert jnp.allclose(out, ref, atol=1e-5), "mismatch vs reference (dense path)"

    # Small-tensor XLA fallback must agree with the kernel path.
    out_fb = jax.block_until_ready(drop_path(x, drop_prob, training=True, key=kmask))
    assert jnp.allclose(out_fb, ref, atol=1e-5)

    # --- Test 2: eval mode -> identity ---
    module = DropPath(drop_prob=drop_prob)
    module.training = False
    out_eval = jax.block_until_ready(module(x))
    assert jnp.array_equal(out_eval, x)

    # --- Test 3: bf16, ragged F = 1050 (full-batch lane-slab path, masked partial block) ---
    xb = jax.random.normal(kx2, (2, 3, 7, 50), dtype=jnp.bfloat16)
    outb = jax.block_until_ready(
        drop_path(xb, 0.5, training=True, key=kmask2, force_pallas=True))
    ub = jax.random.uniform(kmask2, (2,), dtype=jnp.float32)
    maskb = jnp.floor(0.5 + ub).reshape(2, 1, 1, 1)
    refb = (xb.astype(jnp.float32) * (maskb / 0.5)).astype(jnp.bfloat16)
    assert outb.shape == xb.shape and outb.dtype == xb.dtype
    assert jnp.allclose(outb.astype(jnp.float32), refb.astype(jnp.float32),
                        atol=5e-2, rtol=2e-2)

    # --- Test 4: larger f32 tensor -> multi-row-block grid with a partial sublane block ---
    xl = jax.random.normal(kx3, (2, 10, 512, 512), dtype=jnp.float32)   # 10 MiB per sample
    outl = jax.block_until_ready(drop_path(xl, 0.25, training=True, key=kmask3))
    ul = jax.random.uniform(kmask3, (2,), dtype=jnp.float32)
    maskl = jnp.floor(0.75 + ul).reshape(2, 1, 1, 1)
    refl = xl / 0.75 * maskl
    assert jnp.allclose(outl, refl, atol=1e-5), "mismatch vs reference (large path)"

    print("KERNEL_OK")
</pallas_src>

<mosaic_0001>
module attributes {stable_mosaic.version = 11 : i64} {
  func.func @_drop_path_kernel_per_sample(%arg0: i32, %arg1: i32, %arg2: memref<2xf32, #tpu.memory_space<smem>>, %arg3: memref<1x2x512xf32, #tpu.memory_space<vmem>>, %arg4: memref<1x2x512xf32, #tpu.memory_space<vmem>>) attributes {dimension_semantics = [#tpu.dimension_semantics<parallel>, #tpu.dimension_semantics<parallel>], iteration_bounds = array<i64: 1, 2>, scalar_prefetch = 1 : i64, scratch_operands = 0 : i64, tpu.core_type = #tpu.core_type<tc>, window_params = [{transform_indices = @transform_0, window_bounds = array<i64: 1, 2, 512>}, {transform_indices = @transform_1, window_bounds = array<i64: 1, 2, 512>}]} {
    %c0 = arith.constant 0 : index
    %c0_0 = arith.constant 0 : index
    %c0_1 = arith.constant 0 : index
    %0 = vector.load %arg3[%c0, %c0_0, %c0_1] : memref<1x2x512xf32, #tpu.memory_space<vmem>>, vector<1x2x512xf32>
    %1 = arith.index_cast %arg1 : i32 to index
    %2 = memref.load %arg2[%1] : memref<2xf32, #tpu.memory_space<smem>>
    %3 = vector.broadcast %2 : f32 to vector<1x2x512xf32>
    %4 = arith.mulf %0, %3 : vector<1x2x512xf32>
    %c0_2 = arith.constant 0 : index
    %c0_3 = arith.constant 0 : index
    %c0_4 = arith.constant 0 : index
    %5 = vector.load %arg4[%c0_2, %c0_3, %c0_4] : memref<1x2x512xf32, #tpu.memory_space<vmem>>, vector<1x2x512xf32>
    tpu.vector_store %arg4[%c0_2, %c0_3, %c0_4], %4 {strides = array<i32>} : memref<1x2x512xf32, #tpu.memory_space<vmem>>, vector<1x2x512xf32>,
    return
  }
  func.func @transform_0(%arg0: i32, %arg1: i32, %arg2: memref<2xf32, #tpu.memory_space<smem>>) -> (i32, i32, i32) {
    %c0_i32 = arith.constant 0 : i32
    %c0_i32_0 = arith.constant 0 : i32
    return %arg1, %arg0, %c0_i32 : i32, i32, i32
  }
  func.func @transform_1(%arg0: i32, %arg1: i32, %arg2: memref<2xf32, #tpu.memory_space<smem>>) -> (i32, i32, i32) {
    %c0_i32 = arith.constant 0 : i32
    %c0_i32_0 = arith.constant 0 : i32
    return %arg1, %arg0, %c0_i32 : i32, i32, i32
  }
}

</mosaic_0001>

<llo_original>
// kernel: tpu_custom_call.1
$region0: #{tpu_custom_call.1}
  #allocation0 [shape = 'u32[]', space=smem, size = 0x4, offset = 0x4, fixed_abs, tag = 'smem constant byte address 0x4 - core index']
  #allocation1 [shape = 'u32[144,128]{1,0:T(1,128)}', space=vmem, size = 0x12000, scoped, tag = 'internal scratch']
  #allocation2 [shape = 's32[1]{0}', space=sflag, size = 0x4, scoped, tag = 'scoped memory for tpu_custom_call.1']
  #allocation3 [shape = 'u8[512]{0}', space=smem, size = 0x200, scoped, tag = 'prefetched SMEM operand 0']
  %s0 = inlined_call_operand.hbm [shape: f32[2], index: 0, kind: input, shape index: {}]
  %s1 = inlined_call_operand.hbm [shape: f32[2,2,512], index: 1, kind: input, shape index: {}]
  %s2 = inlined_call_operand.hbm [shape: f32[2,2,512], index: 2, kind: output, shape index: {}]
  %s3 = sld [smem:[#allocation0]]
  $region41: #{tpu_custom_call.1} parent=0
    _
  %s5 = ssub.s32 1, %s3
  %s6 = scalar_select 0, %s5, %s3
  %8 = dma.hbm_to_smem %s0, 16, [#allocation3], [#allocation2]
  %9 = dma.done [#allocation2], 16
  %10 = sfence
  $region1: #{tpu_custom_call.1} parent=0
    #allocation4 [shape = 'u8[8192]{0}', space=vmem, size = 0x2000, scoped, tag = 'input window, operand 1']
    #allocation5 [shape = 's32[2]{0}', space=sflag, size = 0x8, scoped, tag = 'scoped memory for tpu_custom_call.1']
    #allocation6 [shape = 's32[2]{0}', space=sflag, size = 0x8, scoped, tag = 'scoped memory for tpu_custom_call.1']
    #allocation7 [shape = 'u8[8192]{0}', space=vmem, size = 0x2000, scoped, tag = 'output window, operand 0']
    %11 = vsyncpa [#allocation5], 0
    %s12 = scalar_lea.sflag [#allocation5], 1
    %13 = vsyncpa %s12, 0
    %14 = vsyncpa [#allocation6], 0
    %s15 = scalar_lea.sflag [#allocation6], 1
    %16 = vsyncpa %s15, 0
    loop: start=0, step=1, limit=4
    $region2: #{tpu_custom_call.1} parent=1 // loop_pre_header
      _
    $region3: #{tpu_custom_call.1} parent=1 // loop_header
      %s18 = sphi 0, %s22
      %p19 = scmp.ge.s32.totalorder %s18, 4
      %s25 = sphi 0, %s37
      %s26 = sphi 0, %s33
      %s27 = sphi 0, %s25
      %s28 = sphi 0, %s26
      %s29 = sphi 0, %s27
      %s30 = sphi 0, %s28
      %s42 = sphi 0, %s44
      %s45 = sphi 0, %s42
      %s46 = sphi 0, %s45
      %s62 = sphi 0, %s46
      %s70 = sphi 0, %s72
      %s73 = sphi 0, %s70
      %s74 = sphi 0, %s73
      %s90 = sphi 0, %s74
    $region4: #{tpu_custom_call.1} parent=1 // loop_header_branch
      %21 = sbr.rel (%p19) target = $region8
    $region5: #{tpu_custom_call.1} parent=1 // loop_body
      %s23 = ssub.s32 %s18, 1
      %s24 = ssub.s32 %s18, 2
      %s31 = sadd.s32 1, %s26
      %p32 = scmp.ge.s32.totalorder %s31, 2
      %s33 = scalar_select %p32, 0, %s31
      %s34 = sadd.s32 1, %s25
      %s35 = scalar_select %p32, %s34, %s25
      %p36 = scmp.ge.s32.totalorder %s35, 1
      %s37 = scalar_select %p36, 0, %s35
      %s38 = ssub.s32 %s26, %s33
      %s39 = ssub.s32 %s25, %s37
      %s40 = sor.u32 %s38, %s39
      %p41 = scmp.eq.s32.totalorder %s40, 0
      %s43 = sadd.s32 %s42, 1
      %s44 = scalar_select %p41, %s42, %s43
      %p47 = pneg %p41
      %p48 = scmp.eq.s32.totalorder %s18, 1
      %p49 = por %p47, %p48
      %p50 = scmp.ne.s32.totalorder %s42, %s45
      %p51 = scmp.eq.s32.totalorder %s18, 0
      %p52 = por %p50, %p51
      %p53 = scmp.ne.s32.totalorder %s42, %s45
      %p54 = scmp.eq.s32.totalorder %s23, 1
      %p55 = por %p53, %p54
      %p56 = scmp.ne.s32.totalorder %s45, %s46
      %p57 = scmp.eq.s32.totalorder %s23, 0
      %p58 = por %p56, %p57
      %p59 = scmp.ne.s32.totalorder %s45, %s46
      %p60 = scmp.eq.s32.totalorder %s24, 1
      %p61 = por %p59, %p60
      %p63 = scmp.ne.s32.totalorder %s46, %s62
      %p64 = scmp.eq.s32.totalorder %s24, 0
      %p65 = por %p63, %p64
      %s66 = ssub.s32 %s26, %s33
      %s67 = ssub.s32 %s25, %s37
      %s68 = sor.u32 %s66, %s67
      %p69 = scmp.eq.s32.totalorder %s68, 0
      %s71 = sadd.s32 %s70, 1
      %s72 = scalar_select %p69, %s70, %s71
      %p75 = pneg %p69
      %p76 = scmp.eq.s32.totalorder %s18, 1
      %p77 = por %p75, %p76
      %p78 = scmp.ne.s32.totalorder %s70, %s73
      %p79 = scmp.eq.s32.totalorder %s18, 0
      %p80 = por %p78, %p79
      %p81 = scmp.ne.s32.totalorder %s70, %s73
      %p82 = scmp.eq.s32.totalorder %s23, 1
      %p83 = por %p81, %p82
      %p84 = scmp.ne.s32.totalorder %s73, %s74
      %p85 = scmp.eq.s32.totalorder %s23, 0
      %p86 = por %p84, %p85
      %p87 = scmp.ne.s32.totalorder %s73, %s74
      %p88 = scmp.eq.s32.totalorder %s24, 1
      %p89 = por %p87, %p88
      %p91 = scmp.ne.s32.totalorder %s74, %s90
      %p92 = scmp.eq.s32.totalorder %s24, 0
      %p93 = por %p91, %p92
      %p94 = scmp.le.s32.totalorder 1, %s18
      %p95 = scmp.lt.s32.totalorder %s18, 3
      %p96 = pnand %p94, %p95
      %p97 = pneg %p96
      // Predicated region
      $region9: #{tpu_custom_call.1} parent=5 // pred_check
        _
      $region10: #{tpu_custom_call.1} parent=5 // pred_check_branch
        %99 = sbr.rel (%p96) target = $region12
      $region11: #{tpu_custom_call.1} parent=5 // pred_region
        %s100 = ssub.s32 %s18, 1
      $region12: #{tpu_custom_call.1} parent=5 // pred_fallthru
        _
      %p101 = scmp.lt.s32.totalorder %s18, 2
      // Predicated region
      $region13: #{tpu_custom_call.1} parent=5 // pred_check
        %p102 = pneg %p101
      $region14: #{tpu_custom_call.1} parent=5 // pred_check_branch
        %104 = sbr.rel (%p102) target = $region16
      $region15: #{tpu_custom_call.1} parent=5 // pred_region
        // Predicated region
        $region17: #{tpu_custom_call.1} parent=15 // pred_check
          %p105 = pneg %p52
        $region18: #{tpu_custom_call.1} parent=15 // pred_check_branch
          %107 = sbr.rel (%p105) target = $region20
        $region19: #{tpu_custom_call.1} parent=15 // pred_region
          %s108 = sand.u32 %s42, 1
          %s109 = scalar_lea.sflag [#allocation5], %s108
          %s110 = sand.u32 %s42, 1
          %s111 = smul.addr %s110, 8
          %s112 = scalar_lea.vmem [#allocation4], %s111
          %s114 = ssub.s32 128, 128
          %115 = vsyncadd %s109, %s114
          %s116 = smul.addr %s25, 4
          %s117 = smul.addr %s26, 4
          %s118 = sadd.s32 %s116, %s117
          %s119 = smul.addr %s118, 32
          %s120 = scalar_lea.hbm %s1, %s119
          %s122 = sshll.u32 %s112, 4
          %s123 = int_to_ptr.vmem [resolvable:$true] %s122
          %125 = dma.hbm_to_vmem [thread:$0]  %s120, 128, %s123, %s109
        $region20: #{tpu_custom_call.1} parent=15 // pred_fallthru
          _
      $region16: #{tpu_custom_call.1} parent=5 // pred_fallthru
        _
      %p126 = scmp.le.s32.totalorder 1, %s18
      %p127 = scmp.lt.s32.totalorder %s18, 3
      %p128 = pnand %p126, %p127
      %p129 = pneg %p128
      // Predicated region
      $region21: #{tpu_custom_call.1} parent=5 // pred_check
        _
      $region22: #{tpu_custom_call.1} parent=5 // pred_check_branch
        %131 = sbr.rel (%p128) target = $region24
      $region23: #{tpu_custom_call.1} parent=5 // pred_region
        %s132 = ssub.s32 %s18, 1
        %s133 = sand.u32 %s45, 1
        %s134 = scalar_lea.sflag [#allocation5], %s133
        %s135 = sand.u32 %s45, 1
        %s136 = smul.addr %s135, 8
        %s137 = scalar_lea.vmem [#allocation4], %s136
        // Predicated region
        $region25: #{tpu_custom_call.1} parent=23 // pred_check
          %p138 = pneg %p58
        $region26: #{tpu_custom_call.1} parent=23 // pred_check_branch
          %140 = sbr.rel (%p138) target = $region28
        $region27: #{tpu_custom_call.1} parent=23 // pred_region
          %141 = dma.done %s134, 128
        $region28: #{tpu_custom_call.1} parent=23 // pred_fallthru
          _
        %s142 = sand.u32 %s45, 1
        %s143 = scalar_lea.sflag [#allocation5], %s142
        %s144 = sand.u32 %s45, 1
        %s145 = smul.addr %s144, 8
        %s146 = scalar_lea.vmem [#allocation4], %s145
        %p147 = pneg %p58
        %p148 = pneg %p55
        %p149 = pneg %p86
        %p150 = pneg %p83
        %s151 = sand.u32 %s73, 1
        %s152 = scalar_lea.sflag [#allocation6], %s151
        %s153 = sand.u32 %s73, 1
        %s154 = smul.addr %s153, 8
        %s155 = scalar_lea.vmem [#allocation7], %s154
        %v156 = vld [vmem:[%s137] sm:$0xff]
        %s157 = sld [smem:[#allocation3 + %s28]]
        %v158 = vstv %s157
        %v159 = vmul.f32 %v156, %v158
        %160 = vst [vmem:[%s155] sm:$0xff] %v159
        %s161 = sand.u32 %s73, 1
        %s162 = scalar_lea.sflag [#allocation6], %s161
        %s163 = sand.u32 %s73, 1
        %s164 = smul.addr %s163, 8
        %s165 = scalar_lea.vmem [#allocation7], %s164
        // Predicated region
        $region29: #{tpu_custom_call.1} parent=23 // pred_check
          %p166 = pneg %p83
        $region30: #{tpu_custom_call.1} parent=23 // pred_check_branch
          %168 = sbr.rel (%p166) target = $region32
        $region31: #{tpu_custom_call.1} parent=23 // pred_region
          %s170 = ssub.s32 128, 128
          %171 = vsyncadd %s162, %s170
          %s172 = smul.addr %s27, 4
          %s173 = smul.addr %s28, 4
          %s174 = sadd.s32 %s172, %s173
          %s175 = smul.addr %s174, 32
          %s176 = scalar_lea.hbm %s2, %s175
          %s178 = sshll.u32 %s165, 4
          %s179 = int_to_ptr.vmem [resolvable:$true] %s178
          %181 = dma.vmem_to_hbm [thread:$0]  %s179, 128, %s176, %s162
        $region32: #{tpu_custom_call.1} parent=23 // pred_fallthru
          _
      $region24: #{tpu_custom_call.1} parent=5 // pred_fallthru
        _
      %p182 = scmp.le.s32.totalorder 2, %s18
      // Predicated region
      $region33: #{tpu_custom_call.1} parent=5 // pred_check
        %p183 = pneg %p182
      $region34: #{tpu_custom_call.1} parent=5 // pred_check_branch
        %185 = sbr.rel (%p183) target = $region36
      $region35: #{tpu_custom_call.1} parent=5 // pred_region
        %s186 = ssub.s32 %s18, 2
        // Predicated region
        $region37: #{tpu_custom_call.1} parent=35 // pred_check
          %p187 = pneg %p89
        $region38: #{tpu_custom_call.1} parent=35 // pred_check_branch
          %189 = sbr.rel (%p187) target = $region40
        $region39: #{tpu_custom_call.1} parent=35 // pred_region
          %s190 = sand.u32 %s74, 1
          %s191 = scalar_lea.sflag [#allocation6], %s190
          %s192 = sand.u32 %s74, 1
          %s193 = smul.addr %s192, 8
          %s194 = scalar_lea.vmem [#allocation7], %s193
          %195 = dma.done %s191, 128
        $region40: #{tpu_custom_call.1} parent=35 // pred_fallthru
          _
      $region36: #{tpu_custom_call.1} parent=5 // pred_fallthru
        _
    $region6: #{tpu_custom_call.1} parent=1 // loop_footer
      %s22 = sadd.s32 1, %s18
    $region7: #{tpu_custom_call.1} parent=1 // loop_footer_branch
      %17 = sbr.rel target = $region3
    $region8: #{tpu_custom_call.1} parent=1 // loop_exit
      _
    %196 = vsyncpa [#allocation5], 1
    %s197 = scalar_lea.sflag [#allocation5], 1
    %198 = vsyncpa %s197, 1
    %199 = vsyncpa [#allocation6], 1
    %s200 = scalar_lea.sflag [#allocation6], 1
    %201 = vsyncpa %s200, 1

</llo_original>
